<compile_context>
chip_gen: v7x
topology: tpu7x:2x2x1
jax: 0.10.0
libtpu: 0.0.40
codegen_flags: <defaults>
</compile_context>

<pallas_src>
import math
from functools import partial

import jax
import jax.numpy as jnp
from jax import lax
from jax.experimental import pallas as pl
from jax.experimental.pallas import tpu as pltpu


def _round_up(x, m):
    return ((x + m - 1) // m) * m


def _pick_tile(dim, pref):
    """pref if it evenly tiles dim, else the full dim (always layout-legal)."""
    return pref if (dim >= pref and dim % pref == 0) else dim


def _heads_per_block(h, d_k):
    """Smallest head group G (dividing h) whose lane width G*d_k is 128-divisible,
    falling back to all heads (block width == d_model, always legal)."""
    for g in range(1, h + 1):
        if h % g == 0 and (g * d_k) % 128 == 0:
            return g
    return h


# ---------------------------------------------------------------------------
# Linear: y = x @ W_t + b   (W_t already [K, N]); grid (M, N, K), f32 accumulator.
# ---------------------------------------------------------------------------
def _linear_kernel(x_ref, w_ref, b_ref, o_ref, acc_ref):
    # x_ref: (TM, TK)  w_ref: (TK, TN)  b_ref: (1, TN)  o_ref: (TM, TN)  acc_ref: f32 (TM, TN)
    kk = pl.program_id(2)

    @pl.when(kk == 0)
    def _():
        acc_ref[...] = jnp.zeros_like(acc_ref)

    acc_ref[...] += jnp.dot(x_ref[...], w_ref[...],
                            preferred_element_type=jnp.float32)

    @pl.when(kk == pl.num_programs(2) - 1)
    def _():
        o_ref[...] = (acc_ref[...] + b_ref[...].astype(jnp.float32)).astype(o_ref.dtype)


def linear(x2d, w_t, bias, *, tm=256, tn=256, tk=512):
    """x2d: [M, K]; w_t: [K, N] (pre-transposed); bias: [N]  ->  [M, N]."""
    M, K = x2d.shape
    K2, N = w_t.shape
    assert K == K2
    TM = min(tm, _round_up(M, 8))
    Mp = _round_up(M, TM)
    if Mp != M:
        x2d = jnp.pad(x2d, ((0, Mp - M), (0, 0)))
    TN = _pick_tile(N, tn)
    TK = _pick_tile(K, tk)
    b2d = bias.reshape(1, N)

    itemsize = jnp.dtype(x2d.dtype).itemsize
    cost = pl.CostEstimate(
        flops=2 * Mp * K * N,
        transcendentals=0,
        bytes_accessed=(Mp * K + K * N + N + Mp * N) * itemsize)

    out = pl.pallas_call(
        _linear_kernel,
        out_shape=jax.ShapeDtypeStruct((Mp, N), x2d.dtype),
        grid_spec=pltpu.PrefetchScalarGridSpec(
            num_scalar_prefetch=0,
            grid=(Mp // TM, N // TN, K // TK),
            in_specs=[
                pl.BlockSpec((TM, TK), lambda i, j, kk: (i, kk)),
                pl.BlockSpec((TK, TN), lambda i, j, kk: (kk, j)),
                pl.BlockSpec((1, TN), lambda i, j, kk: (0, j)),
            ],
            out_specs=pl.BlockSpec((TM, TN), lambda i, j, kk: (i, j)),
            scratch_shapes=[pltpu.VMEM((TM, TN), jnp.float32)],
        ),
        compiler_params=pltpu.CompilerParams(
            dimension_semantics=("parallel", "parallel", "arbitrary")),
        cost_estimate=cost,
    )(x2d, w_t, b2d)
    return out[:M]


# ---------------------------------------------------------------------------
# Flash-style attention over head groups; Q/K/V stay in [B, S, d_model] layout.
# ---------------------------------------------------------------------------
def _flash_attention_kernel(q_ref, k_ref, v_ref, mask_ref, o_ref,
                            m_sc, l_sc, acc_sc, *, scale, G, d_k):
    # q_ref: (TQ, G*d_k)  k_ref/v_ref: (TKV, G*d_k)  mask_ref: (TQ, TKV) int8
    # scratch: m/l (G, TQ, 1) f32, acc (G, TQ, d_k) f32
    ki = pl.program_id(3)
    nk = pl.num_programs(3)

    @pl.when(ki == 0)
    def _():
        m_sc[...] = jnp.full(m_sc.shape, -jnp.inf, m_sc.dtype)
        l_sc[...] = jnp.zeros_like(l_sc)
        acc_sc[...] = jnp.zeros_like(acc_sc)

    q = q_ref[...]
    k = k_ref[...]
    v = v_ref[...]
    is_masked = mask_ref[...].astype(jnp.float32) == 0.0   # (TQ, TKV), hoisted out of loop
    neg = jnp.float32(-1e9)

    for g in range(G):                                     # static unroll over head group
        lo, hi = g * d_k, (g + 1) * d_k
        s = lax.dot_general(q[:, lo:hi], k[:, lo:hi],
                            dimension_numbers=(((1,), (1,)), ((), ())),
                            preferred_element_type=jnp.float32) * scale
        s = jnp.where(is_masked, neg, s)
        m_prev = m_sc[g, :, :]
        m_new = jnp.maximum(m_prev, jnp.max(s, axis=-1, keepdims=True))
        alpha = jnp.exp(m_prev - m_new)
        p = jnp.exp(s - m_new)
        l_sc[g, :, :] = alpha * l_sc[g, :, :] + jnp.sum(p, axis=-1, keepdims=True)
        # TODO(synk): dropout on attention probabilities treated as identity (inference).
        acc_sc[g, :, :] = alpha * acc_sc[g, :, :] + jnp.dot(
            p.astype(v.dtype), v[:, lo:hi], preferred_element_type=jnp.float32)
        m_sc[g, :, :] = m_new

    @pl.when(ki == nk - 1)
    def _():
        outs = []
        for g in range(G):
            inv = pl.reciprocal(l_sc[g, :, :], approx=True)
            outs.append(acc_sc[g, :, :] * inv)
        # single lane-dense store of the whole head group
        o_ref[...] = jnp.concatenate(outs, axis=-1).astype(o_ref.dtype)


def attention(q3, k3, v3, mask_i8, *, h, tq=256, tkv=512):
    """q3/k3/v3: [B, S, d_model]; mask_i8: [B, 1, S, S] int8 (0 = masked)."""
    B, S, d_model = q3.shape
    d_k = d_model // h
    G = _heads_per_block(h, d_k)
    HG = h // G
    Gd = G * d_k
    TQ = _pick_tile(S, tq)
    TKV = _pick_tile(S, tkv)
    scale = 1.0 / math.sqrt(d_k)

    kern = partial(_flash_attention_kernel, scale=scale, G=G, d_k=d_k)
    itemsize = jnp.dtype(q3.dtype).itemsize
    cost = pl.CostEstimate(
        flops=4 * B * h * S * S * d_k,
        transcendentals=B * h * S * S,
        bytes_accessed=4 * B * S * d_model * itemsize + B * S * S)

    return pl.pallas_call(
        kern,
        out_shape=jax.ShapeDtypeStruct((B, S, d_model), q3.dtype),
        grid_spec=pltpu.PrefetchScalarGridSpec(
            num_scalar_prefetch=0,
            grid=(B, HG, S // TQ, S // TKV),
            in_specs=[
                pl.BlockSpec((None, TQ, Gd), lambda b, hg, qi, ki: (b, qi, hg)),
                pl.BlockSpec((None, TKV, Gd), lambda b, hg, qi, ki: (b, ki, hg)),
                pl.BlockSpec((None, TKV, Gd), lambda b, hg, qi, ki: (b, ki, hg)),
                pl.BlockSpec((None, None, TQ, TKV), lambda b, hg, qi, ki: (b, 0, qi, ki)),
            ],
            out_specs=pl.BlockSpec((None, TQ, Gd), lambda b, hg, qi, ki: (b, qi, hg)),
            scratch_shapes=[
                pltpu.VMEM((G, TQ, 1), jnp.float32),    # running max   m
                pltpu.VMEM((G, TQ, 1), jnp.float32),    # running sum   l
                pltpu.VMEM((G, TQ, d_k), jnp.float32),  # running numer acc
            ],
        ),
        compiler_params=pltpu.CompilerParams(
            dimension_semantics=("parallel", "parallel", "parallel", "arbitrary")),
        cost_estimate=cost,
    )(q3, k3, v3, mask_i8)


# ---------------------------------------------------------------------------
# Full MultiHeadAttentionBlock forward.
# ---------------------------------------------------------------------------
def prepare_params(params):
    """One-time prep: transpose weights to [K, N] (MXU-native) and build fused QKV."""
    prep = {}
    for n in ("q", "k", "v", "o"):
        prep[f"w_{n}"] = jnp.asarray(params[f"w_{n}"]).T
        prep[f"b_{n}"] = jnp.asarray(params[f"b_{n}"])
    prep["w_qkv"] = jnp.concatenate([prep["w_q"], prep["w_k"], prep["w_v"]], axis=1)
    prep["b_qkv"] = jnp.concatenate([prep["b_q"], prep["b_k"], prep["b_v"]])
    return prep


def multi_head_attention_block(q, k, v, mask, prep, *, h):
    B, S, d_model = q.shape

    if q is k and k is v:
        # Self-attention: one fused QKV projection (reads activations once).
        qkv = linear(q.reshape(B * S, d_model), prep["w_qkv"], prep["b_qkv"])
        Q = qkv[:, :d_model]
        K_ = qkv[:, d_model:2 * d_model]
        V = qkv[:, 2 * d_model:]
    else:
        Q = linear(q.reshape(B * S, d_model), prep["w_q"], prep["b_q"])
        K_ = linear(k.reshape(B * S, d_model), prep["w_k"], prep["b_k"])
        V = linear(v.reshape(B * S, d_model), prep["w_v"], prep["b_v"])
    Q = Q.reshape(B, S, d_model)
    K_ = K_.reshape(B, S, d_model)
    V = V.reshape(B, S, d_model)

    if mask is None:
        mask_i8 = jnp.ones((B, 1, S, S), dtype=jnp.int8)
    else:
        mask_i8 = (jnp.broadcast_to(mask, (B, 1, S, S)) != 0).astype(jnp.int8)

    x = attention(Q, K_, V, mask_i8, h=h)                 # [B, S, d_model] (no head transposes)
    out = linear(x.reshape(B * S, d_model), prep["w_o"], prep["b_o"])
    return out.reshape(B, S, d_model)


# ---------------------------------------------------------------------------
# Reference (plain JAX, mirrors the PyTorch module) + demo.
# ---------------------------------------------------------------------------
def _reference(q, k, v, mask, params, *, h):
    B, S, d_model = q.shape
    d_k = d_model // h

    def proj(x, w, b):
        return (x @ w.T + b).reshape(B, S, h, d_k).transpose(0, 2, 1, 3)

    Q = proj(q, params["w_q"], params["b_q"])
    K = proj(k, params["w_k"], params["b_k"])
    V = proj(v, params["w_v"], params["b_v"])
    s = (Q @ jnp.swapaxes(K, -1, -2)) / math.sqrt(d_k)
    s = jnp.where(mask == 0, -1e9, s)
    p = jax.nn.softmax(s, axis=-1)
    x = (p @ V).transpose(0, 2, 1, 3).reshape(B, S, d_model)
    return x @ params["w_o"].T + params["b_o"]


if __name__ == "__main__":
    B, S, d_model, h = 2, 8, 32, 4

    key = jax.random.PRNGKey(0)
    keys = jax.random.split(key, 12)
    bound = 1.0 / math.sqrt(d_model)

    def u(kk, shape):
        return jax.random.uniform(kk, shape, jnp.float32, -bound, bound)

    params = {
        "w_q": u(keys[0], (d_model, d_model)), "b_q": u(keys[1], (d_model,)),
        "w_k": u(keys[2], (d_model, d_model)), "b_k": u(keys[3], (d_model,)),
        "w_v": u(keys[4], (d_model, d_model)), "b_v": u(keys[5], (d_model,)),
        "w_o": u(keys[6], (d_model, d_model)), "b_o": u(keys[7], (d_model,)),
    }
    prep = prepare_params(params)

    q = jax.random.normal(keys[8], (B, S, d_model), dtype=jnp.float32)
    k = jax.random.normal(keys[9], (B, S, d_model), dtype=jnp.float32)
    v = jax.random.normal(keys[10], (B, S, d_model), dtype=jnp.float32)

    causal = jnp.tril(jnp.ones((S, S), dtype=jnp.float32))
    mask = jnp.tile(causal[None, None], (B, 1, 1, 1))      # [B, 1, S, S]

    # Cross-attention path (distinct q/k/v).
    out = jax.block_until_ready(multi_head_attention_block(q, k, v, mask, prep, h=h))
    ref = _reference(q, k, v, mask, params, h=h)
    assert out.shape == (B, S, d_model)
    assert jnp.allclose(out, ref, atol=2e-3, rtol=2e-3), \
        f"max abs err {jnp.max(jnp.abs(out - ref))}"

    # Self-attention path (exercises the fused QKV projection).
    out_s = jax.block_until_ready(multi_head_attention_block(q, q, q, mask, prep, h=h))
    ref_s = _reference(q, q, q, mask, params, h=h)
    assert jnp.allclose(out_s, ref_s, atol=2e-3, rtol=2e-3), \
        f"max abs err {jnp.max(jnp.abs(out_s - ref_s))}"

    print("KERNEL_OK")
</pallas_src>

<mosaic_0001>
module attributes {stable_mosaic.version = 11 : i64} {
  func.func @_linear_kernel(%arg0: i32, %arg1: i32, %arg2: i32, %arg3: memref<16x32xf32, #tpu.memory_space<vmem>>, %arg4: memref<32x32xf32, #tpu.memory_space<vmem>>, %arg5: memref<1x32xf32, #tpu.memory_space<vmem>>, %arg6: memref<16x32xf32, #tpu.memory_space<vmem>>, %arg7: memref<16x32xf32, #tpu.memory_space<vmem>>) attributes {dimension_semantics = [#tpu.dimension_semantics<parallel>, #tpu.dimension_semantics<parallel>, #tpu.dimension_semantics<arbitrary>], iteration_bounds = array<i64: 1, 1, 1>, scalar_prefetch = 0 : i64, scratch_operands = 1 : i64, tpu.core_type = #tpu.core_type<tc>, window_params = [{transform_indices = @transform_0, window_bounds = array<i64: 16, 32>}, {transform_indices = @transform_1, window_bounds = array<i64: 32, 32>}, {transform_indices = @transform_2, window_bounds = array<i64: 1, 32>}, {transform_indices = @transform_3, window_bounds = array<i64: 16, 32>}]} {
    %c0_i32 = arith.constant 0 : i32
    %0 = arith.cmpi eq, %arg2, %c0_i32 : i32
    %1 = arith.extui %0 : i1 to i32
    %c0_i32_0 = arith.constant 0 : i32
    %2 = arith.cmpi ne, %1, %c0_i32_0 : i32
    scf.if %2 {
      %cst_10 = arith.constant 0.000000e+00 : f32
      %12 = vector.broadcast %cst_10 : f32 to vector<16x32xf32>
      %c0_11 = arith.constant 0 : index
      %c0_12 = arith.constant 0 : index
      %13 = vector.load %arg7[%c0_11, %c0_12] : memref<16x32xf32, #tpu.memory_space<vmem>>, vector<16x32xf32>
      tpu.vector_store %arg7[%c0_11, %c0_12], %12 {strides = array<i32>} : memref<16x32xf32, #tpu.memory_space<vmem>>, vector<16x32xf32>,
    } else {
    }
    %c0 = arith.constant 0 : index
    %c0_1 = arith.constant 0 : index
    %3 = vector.load %arg7[%c0, %c0_1] : memref<16x32xf32, #tpu.memory_space<vmem>>, vector<16x32xf32>
    %c0_2 = arith.constant 0 : index
    %c0_3 = arith.constant 0 : index
    %4 = vector.load %arg3[%c0_2, %c0_3] : memref<16x32xf32, #tpu.memory_space<vmem>>, vector<16x32xf32>
    %c0_4 = arith.constant 0 : index
    %c0_5 = arith.constant 0 : index
    %5 = vector.load %arg4[%c0_4, %c0_5] : memref<32x32xf32, #tpu.memory_space<vmem>>, vector<32x32xf32>
    %cst = arith.constant dense<0.000000e+00> : vector<16x32xf32>
    %6 = tpu.matmul %4, %5, %cst {dimension_numbers = #tpu.dot_dimension_numbers<[1], [0], [0], [1], [0, 0, 1, 1], [], []>} : vector<16x32xf32>, vector<32x32xf32>, vector<16x32xf32> -> vector<16x32xf32>
    %7 = arith.addf %3, %6 : vector<16x32xf32>
    %c0_6 = arith.constant 0 : index
    %c0_7 = arith.constant 0 : index
    %8 = vector.load %arg7[%c0_6, %c0_7] : memref<16x32xf32, #tpu.memory_space<vmem>>, vector<16x32xf32>
    tpu.vector_store %arg7[%c0_6, %c0_7], %7 {strides = array<i32>} : memref<16x32xf32, #tpu.memory_space<vmem>>, vector<16x32xf32>,
    %c0_i32_8 = arith.constant 0 : i32
    %9 = arith.cmpi eq, %arg2, %c0_i32_8 : i32
    %10 = arith.extui %9 : i1 to i32
    %c0_i32_9 = arith.constant 0 : i32
    %11 = arith.cmpi ne, %10, %c0_i32_9 : i32
    scf.if %11 {
      %c0_10 = arith.constant 0 : index
      %c0_11 = arith.constant 0 : index
      %12 = vector.load %arg7[%c0_10, %c0_11] : memref<16x32xf32, #tpu.memory_space<vmem>>, vector<16x32xf32>
      %c0_12 = arith.constant 0 : index
      %c0_13 = arith.constant 0 : index
      %13 = vector.load %arg5[%c0_12, %c0_13] : memref<1x32xf32, #tpu.memory_space<vmem>>, vector<1x32xf32>
      %14 = vector.broadcast %13 : vector<1x32xf32> to vector<16x32xf32>
      %15 = arith.addf %12, %14 : vector<16x32xf32>
      %c0_14 = arith.constant 0 : index
      %c0_15 = arith.constant 0 : index
      %16 = vector.load %arg6[%c0_14, %c0_15] : memref<16x32xf32, #tpu.memory_space<vmem>>, vector<16x32xf32>
      tpu.vector_store %arg6[%c0_14, %c0_15], %15 {strides = array<i32>} : memref<16x32xf32, #tpu.memory_space<vmem>>, vector<16x32xf32>,
    } else {
    }
    return
  }
  func.func @transform_0(%arg0: i32, %arg1: i32, %arg2: i32) -> (i32, i32) {
    %c0_i32 = arith.constant 0 : i32
    return %arg0, %arg2 : i32, i32
  }
  func.func @transform_1(%arg0: i32, %arg1: i32, %arg2: i32) -> (i32, i32) {
    %c0_i32 = arith.constant 0 : i32
    return %arg2, %arg1 : i32, i32
  }
  func.func @transform_2(%arg0: i32, %arg1: i32, %arg2: i32) -> (i32, i32) {
    %c0_i32 = arith.constant 0 : i32
    %c0_i32_0 = arith.constant 0 : i32
    return %c0_i32, %arg1 : i32, i32
  }
  func.func @transform_3(%arg0: i32, %arg1: i32, %arg2: i32) -> (i32, i32) {
    %c0_i32 = arith.constant 0 : i32
    return %arg0, %arg1 : i32, i32
  }
}

</mosaic_0001>

<llo_original>
// kernel: tpu_custom_call.1
$region0: #{tpu_custom_call.1}
  #allocation0 [shape = 'u32[]', space=smem, size = 0x4, offset = 0x4, fixed_abs, tag = 'smem constant byte address 0x4 - core index']
  #allocation1 [shape = 'u32[144,128]{1,0:T(1,128)}', space=vmem, size = 0x12000, scoped, tag = 'internal scratch']
  #allocation2 [shape = 'f32[16,32]{1,0:T(8,128)}', space=vmem, size = 0x2000, scoped, tag = 'scratch operand']
  %s0 = inlined_call_operand.hbm [shape: f32[16,32], index: 0, kind: input, shape index: {}]
  %s1 = inlined_call_operand.hbm [shape: f32[32,32], index: 1, kind: input, shape index: {}]
  %s2 = inlined_call_operand.vmem [shape: f32[1,32], index: 2, kind: input, shape index: {}]
  %s3 = inlined_call_operand.hbm [shape: f32[16,32], index: 3, kind: output, shape index: {}]
  %s4 = sld [smem:[#allocation0]]
  $region38: #{tpu_custom_call.1} parent=0
    _
  %s6 = ssub.s32 1, %s4
  %s7 = scalar_select 0, %s6, %s4
  $region1: #{tpu_custom_call.1} parent=0
    #allocation3 [shape = 'u8[8192]{0}', space=vmem, size = 0x2000, scoped, tag = 'input window, operand 0, single buffered']
    #allocation4 [shape = 's32[1]{0}', space=sflag, size = 0x4, scoped, tag = 'scoped memory for tpu_custom_call.1']
    #allocation5 [shape = 's32[1]{0}', space=sflag, size = 0x4, scoped, tag = 'scoped memory for tpu_custom_call.1']
    #allocation6 [shape = 'u8[16384]{0}', space=vmem, size = 0x4000, scoped, tag = 'input window, operand 1, single buffered']
    #allocation7 [shape = 's32[1]{0}', space=sflag, size = 0x4, scoped, tag = 'scoped memory for tpu_custom_call.1']
    #allocation8 [shape = 'u8[8192]{0}', space=vmem, size = 0x2000, scoped, tag = 'output window, operand 0, single buffered']
    %8 = vsyncpa [#allocation4], 0
    %9 = vsyncpa [#allocation7], 0
    %10 = vsyncpa [#allocation5], 0
    // Predicated region
    $region2: #{tpu_custom_call.1} parent=1 // pred_check
      _
    $region3: #{tpu_custom_call.1} parent=1 // pred_check_branch
      %12 = sbr.rel (0) target = $region5
    $region4: #{tpu_custom_call.1} parent=1 // pred_region
      %s14 = ssub.s32 256, 256
      %15 = vsyncadd [#allocation4], %s14
      %s16 = sshll.u32 [#allocation3], 4
      %s17 = int_to_ptr.vmem [resolvable:$true] %s16
      %22 = dma.hbm_to_vmem [thread:$0]  %s0, 256, %s17, [#allocation4], 128, 128, 8
    $region5: #{tpu_custom_call.1} parent=1 // pred_fallthru
      _
    // Predicated region
    $region6: #{tpu_custom_call.1} parent=1 // pred_check
      _
    $region7: #{tpu_custom_call.1} parent=1 // pred_check_branch
      %24 = sbr.rel (0) target = $region9
    $region8: #{tpu_custom_call.1} parent=1 // pred_region
      %s26 = ssub.s32 512, 512
      %27 = vsyncadd [#allocation7], %s26
      %s28 = sshll.u32 [#allocation6], 4
      %s29 = int_to_ptr.vmem [resolvable:$true] %s28
      %34 = dma.hbm_to_vmem [thread:$0]  %s1, 512, %s29, [#allocation7], 128, 128, 8
    $region9: #{tpu_custom_call.1} parent=1 // pred_fallthru
      _
    // Predicated region
    $region10: #{tpu_custom_call.1} parent=1 // pred_check
      _
    $region11: #{tpu_custom_call.1} parent=1 // pred_check_branch
      %36 = sbr.rel (0) target = $region13
    $region12: #{tpu_custom_call.1} parent=1 // pred_region
      _
    $region13: #{tpu_custom_call.1} parent=1 // pred_fallthru
      _
    // Predicated region
    $region14: #{tpu_custom_call.1} parent=1 // pred_check
      _
    $region15: #{tpu_custom_call.1} parent=1 // pred_check_branch
      %38 = sbr.rel (0) target = $region17
    $region16: #{tpu_custom_call.1} parent=1 // pred_region
      %39 = dma.done [#allocation4], 256
    $region17: #{tpu_custom_call.1} parent=1 // pred_fallthru
      _
    // Predicated region
    $region18: #{tpu_custom_call.1} parent=1 // pred_check
      _
    $region19: #{tpu_custom_call.1} parent=1 // pred_check_branch
      %41 = sbr.rel (0) target = $region21
    $region20: #{tpu_custom_call.1} parent=1 // pred_region
      %42 = dma.done [#allocation7], 512
    $region21: #{tpu_custom_call.1} parent=1 // pred_fallthru
      _
    %p43 = scmp.eq.s32.totalorder 0, 0
    // Predicated region
    $region22: #{tpu_custom_call.1} parent=1 // pred_check
      %p44 = pneg %p43
    $region23: #{tpu_custom_call.1} parent=1 // pred_check_branch
      %46 = sbr.rel (%p44) target = $region25
    $region24: #{tpu_custom_call.1} parent=1 // pred_region
      %vm47 = vcmask 261120
      %48 = vst.msk [vmem:[#allocation2] sm:$0xff] %vm47, 0.0
      %49 = vst.msk [vmem:[#allocation2 + $0x8] sm:$0xff] %vm47, 0.0
    $region25: #{tpu_custom_call.1} parent=1 // pred_fallthru
      _
    %v50 = vld [vmem:[#allocation2] sm:$0xff]
    %v51 = vld [vmem:[#allocation2 + $0x8] sm:$0xff]
    %v52 = vld [vmem:[#allocation3] sm:$0xff]
    %v53 = vld [vmem:[#allocation3 + $0x8] sm:$0xff]
    %v54 = vld [vmem:[#allocation6] sm:$0xff]
    %v55 = vld [vmem:[#allocation6 + $0x8] sm:$0xff]
    %v56 = vld [vmem:[#allocation6 + $0x10] sm:$0xff]
    %v57 = vld [vmem:[#allocation6 + $0x18] sm:$0xff]
    %vm58 = vcmask 261120
    %v60 = vsel %vm58, %v52, 0
    %v63 = vsel %vm58, %v53, 0
    %65 = vmatprep.subr.mxu0 0.0
    %66 = vmatpush1.msra.mxu0 %v54
    %67 = vmatprep.subr.mxu0 0.0
    %68 = vmatpush1.msra.mxu0 %v55
    %69 = vmatprep.subr.mxu0 0.0
    %70 = vmatpush1.msra.mxu0 %v56
    %71 = vmatprep.subr.mxu0 0.0
    %72 = vmatpush1.msra.mxu0 %v57
    %73 = vmatprep.subr.mxu0 0.0
    %74 = vmatpush1.msra.mxu0 0.0
    %75 = vmatprep.subr.mxu0 0.0
    %76 = vmatpush1.msra.mxu0 0.0
    %77 = vmatprep.subr.mxu0 0.0
    %78 = vmatpush1.msra.mxu0 0.0
    %79 = vmatprep.subr.mxu0 0.0
    %80 = vmatpush1.msra.mxu0 0.0
    %81 = vmatprep.subr.mxu0 0.0
    %82 = vmatpush1.msra.mxu0 0.0
    %83 = vmatprep.subr.mxu0 0.0
    %84 = vmatpush1.msra.mxu0 0.0
    %85 = vmatprep.subr.mxu0 0.0
    %86 = vmatpush1.msra.mxu0 0.0
    %87 = vmatprep.subr.mxu0 0.0
    %88 = vmatpush1.msra.mxu0 0.0
    %89 = vmatprep.subr.mxu0 0.0
    %90 = vmatpush1.msra.mxu0 0.0
    %91 = vmatprep.subr.mxu0 0.0
    %92 = vmatpush1.msra.mxu0 0.0
    %93 = vmatprep.subr.mxu0 0.0
    %94 = vmatpush1.msra.mxu0 0.0
    %95 = vmatprep.subr.mxu0 0.0
    %96 = vmatpush1.msra.mxu0 0.0
    %97 = vmatprep.subr.mxu0 0.0
    %98 = vmatpush1.msra.mxu0 0.0
    %99 = vmatprep.subr.mxu0 0.0
    %100 = vmatpush1.msra.mxu0 0.0
    %101 = vmatprep.subr.mxu0 0.0
    %102 = vmatpush1.msra.mxu0 0.0
    %103 = vmatprep.subr.mxu0 0.0
    %104 = vmatpush1.msra.mxu0 0.0
    %105 = vmatprep.subr.mxu0 0.0
    %106 = vmatpush1.msra.mxu0 0.0
    %107 = vmatprep.subr.mxu0 0.0
    %108 = vmatpush1.msra.mxu0 0.0
    %109 = vmatprep.subr.mxu0 0.0
    %110 = vmatpush1.msra.mxu0 0.0
    %111 = vmatprep.subr.mxu0 0.0
    %112 = vmatpush1.msra.mxu0 0.0
    %113 = vmatprep.subr.mxu0 0.0
    %114 = vmatpush1.msra.mxu0 0.0
    %115 = vmatprep.subr.mxu0 0.0
    %116 = vmatpush1.msra.mxu0 0.0
    %117 = vmatprep.subr.mxu0 0.0
    %118 = vmatpush1.msra.mxu0 0.0
    %119 = vmatprep.subr.mxu0 0.0
    %120 = vmatpush1.msra.mxu0 0.0
    %121 = vmatprep.subr.mxu0 0.0
    %122 = vmatpush1.msra.mxu0 0.0
    %123 = vmatprep.subr.mxu0 0.0
    %124 = vmatpush1.msra.mxu0 0.0
    %125 = vmatprep.subr.mxu0 0.0
    %126 = vmatpush1.msra.mxu0 0.0
    %127 = vmatprep.subr.mxu0 0.0
    %128 = vmatpush1.msra.mxu0 0.0
    %129 = vmatprep.mubr.f32.mxu0 0.0
    %130 = vmatmul.mubr.f32.gmra.mrb[0].mxu0 %v60
    %v131 = vpop.f32.mrb[0].mxu0
    %v132 = vadd.f32 0.0, %v131
    %v133 = vpop.f32.mrb[0].mxu0
    %134 = vmatprep.mubr.f32.mxu0 0.0
    %135 = vmatmul.mubr.f32.gmra.mrb[0].mxu0 %v63
    %v136 = vpop.f32.mrb[0].mxu0
    %v137 = vadd.f32 0.0, %v136
    %v138 = vpop.f32.mrb[0].mxu0
    %139 = vdwg.mxu0
    %v140 = vadd.f32 %v50, %v132
    %v141 = vadd.f32 %v51, %v137
    %142 = vst.msk [vmem:[#allocation2] sm:$0xff] %vm58, %v140
    %143 = vst.msk [vmem:[#allocation2 + $0x8] sm:$0xff] %vm58, %v141
    // Predicated region
    $region26: #{tpu_custom_call.1} parent=1 // pred_check
      %p144 = pneg %p43
    $region27: #{tpu_custom_call.1} parent=1 // pred_check_branch
      %146 = sbr.rel (%p144) target = $region29
    $region28: #{tpu_custom_call.1} parent=1 // pred_region
      %v147 = vld [vmem:[#allocation2] sm:$0xff]
      %v148 = vld [vmem:[#allocation2 + $0x8] sm:$0xff]
      %v149 = vld [vmem:[%s2] sm:$0x1]
      %v151 = vlaneseq
      %v152 = vshrl.u32 %v151, 7
      %v153 = vsub.s32 0, %v152
      %v154 = vrot.slane %v149, %v153
      %v156 = vadd.f32 %v147, %v154
      %v157 = vadd.f32 %v148, %v154
      %158 = vst.msk [vmem:[#allocation8] sm:$0xff] %vm58, %v156
      %159 = vst.msk [vmem:[#allocation8 + $0x8] sm:$0xff] %vm58, %v157
    $region29: #{tpu_custom_call.1} parent=1 // pred_fallthru
      _
    // Predicated region
    $region30: #{tpu_custom_call.1} parent=1 // pred_check
      _
    $region31: #{tpu_custom_call.1} parent=1 // pred_check_branch
      %161 = sbr.rel (0) target = $region33
    $region32: #{tpu_custom_call.1} parent=1 // pred_region
      %s163 = ssub.s32 256, 256
      %164 = vsyncadd [#allocation5], %s163
      %s165 = sshll.u32 [#allocation8], 4
      %s166 = int_to_ptr.vmem [resolvable:$true] %s165
      %171 = dma.vmem_to_hbm [thread:$0]  %s166, 256, %s3, [#allocation5], 128, 128, 8
    $region33: #{tpu_custom_call.1} parent=1 // pred_fallthru
      _
    // Predicated region
    $region34: #{tpu_custom_call.1} parent=1 // pred_check
      _
    $region35: #{tpu_custom_call.1} parent=1 // pred_check_branch
      %173 = sbr.rel (0) target = $region37
    $region36: #{tpu_custom_call.1} parent=1 // pred_region
      %174 = dma.done [#allocation5], 256
    $region37: #{tpu_custom_call.1} parent=1 // pred_fallthru
      _
    %175 = vsyncpa [#allocation4], 1
    %176 = vsyncpa [#allocation7], 1
    %177 = vsyncpa [#allocation5], 1

</llo_original>
